<compile_context>
chip_gen: v5e
topology: v5e:2x2
jax: 0.10.0
libtpu: 0.0.40
codegen_flags: <defaults>
</compile_context>

<pallas_src>
import functools

import jax
import jax.numpy as jnp
from jax.experimental import pallas as pl
from jax.experimental.pallas import tpu as pltpu

_LANE = 128


def _rmsnorm_kernel(x_ref, w_ref, o_ref, *, eps: float, inv_dim: float):
    # x_ref: (row_tile, dim_p)   w_ref: (1, dim_p) f32   o_ref: (row_tile, dim_p)
    x = x_ref[...].astype(jnp.float32)
    # Sum of squares over the lane axis, divided by the TRUE (unpadded) dim.
    mean_sq = jnp.sum(x * x, axis=-1, keepdims=True) * inv_dim   # (row_tile, 1)
    inv_rms = jax.lax.rsqrt(mean_sq + eps)
    o_ref[...] = (x * inv_rms * w_ref[...]).astype(o_ref.dtype)


def _sublane_multiple(dtype) -> int:
    # Sub-32-bit dtypes pack along sublanes: keep the second-to-last block dim
    # at the packing unit so loads/stores stay full-width.
    itemsize = jnp.dtype(dtype).itemsize
    return {4: 8, 2: 16, 1: 32}.get(itemsize, 8)


def _vmem_capacity_bytes() -> int:
    try:
        return int(pltpu.get_tpu_info().vmem_capacity_bytes)
    except Exception:
        return 64 << 20  # conservative: v7x has 64 MiB per TensorCore


def _num_tensorcores() -> int:
    try:
        kind = jax.devices()[0].device_kind.lower()
        if "v7" in kind or "tpu7" in kind:
            return 2
        for tag in ("v2", "v3", "v4", "v5", "v6"):
            if tag in kind:
                return 1
    except Exception:
        pass
    return 2  # unknown chip: assume megacore (only costs a slightly smaller tile)


def _per_row_vmem_bytes(dim_p: int, itemsize: int) -> int:
    # 2x double-buffered input + 2x double-buffered output (native dtype)
    # + ~2 blocks worth of f32 temporaries (x in f32, scaled product).
    return dim_p * (4 * itemsize + 2 * 4)


def _pick_row_tile(rows: int, dim_p: int, dtype, *, num_tc: int,
                   vmem_budget: int) -> int:
    itemsize = jnp.dtype(dtype).itemsize
    sub = _sublane_multiple(dtype)
    rows_rounded = pl.cdiv(rows, sub) * sub

    per_row = _per_row_vmem_bytes(dim_p, itemsize)
    max_rows_vmem = max(sub, (vmem_budget // per_row) // sub * sub)

    # Block-byte target instead of a fixed row cap: ~16 MiB per input block is
    # comfortably past the ~4 MiB HBM-roofline knee for every generation.
    cap_rows = max(sub, ((16 << 20) // (dim_p * itemsize)) // sub * sub)

    tile = min(max_rows_vmem, cap_rows, rows_rounded)
    tile = max(sub, (tile // sub) * sub)

    # 2-TC chips (v7x): guarantee >= 4 grid steps (>= 2 per TensorCore so the
    # double-buffered DMA actually overlaps compute on each core) and prefer
    # an even step count for load balance.  Skipped on 1-TC chips.
    if num_tc >= 2 and rows_rounded >= 4 * sub:
        tile = min(tile, max(sub, (rows_rounded // 4 // sub) * sub))
        g = pl.cdiv(rows_rounded, tile)
        if g % 2 == 1:  # best-effort: nudge to an even grid
            tile_even = max(sub, pl.cdiv(pl.cdiv(rows_rounded, g + 1), sub) * sub)
            if pl.cdiv(rows_rounded, tile_even) % 2 == 0:
                tile = tile_even
    return int(tile)


def rms_norm(x: jax.Array, weight: jax.Array, eps: float = 1e-6,
             row_tile: int | None = None) -> jax.Array:
    """Pallas RMSNorm over the last axis of x. weight has shape (dim,)."""
    dim = x.shape[-1]
    assert weight.shape == (dim,)
    orig_shape = x.shape
    itemsize = jnp.dtype(x.dtype).itemsize
    sub = _sublane_multiple(x.dtype)

    x2d = x.reshape(-1, dim)
    rows = x2d.shape[0]

    # Lane-dense output: pad dim up to a multiple of 128 with zeros so stores
    # are unmasked vst.  Zero pad-columns do not change the sum of squares;
    # the kernel divides by the true dim.  Production dims (multiples of 128)
    # take the no-pad path and pay nothing.
    dim_p = pl.cdiv(dim, _LANE) * _LANE
    if dim_p != dim:
        x2d = jnp.pad(x2d, ((0, 0), (0, dim_p - dim)))
        w_pad = jnp.pad(weight, (0, dim_p - dim))
    else:
        w_pad = weight
    # Pre-cast weight to f32 once; constant index_map keeps it VMEM-resident.
    w2d = w_pad.reshape(1, dim_p).astype(jnp.float32)

    vmem_cap = _vmem_capacity_bytes()
    # ~48 MiB on v7x (64 MiB/TC), ~96 MiB on 128 MiB parts (v5e/v6e):
    # leave >= 12 MiB headroom for compiler scratch / semaphores.
    vmem_budget = min(vmem_cap - (12 << 20), (vmem_cap * 3) // 4)

    num_tc = _num_tensorcores()
    if row_tile is None:
        row_tile = _pick_row_tile(rows, dim_p, x.dtype,
                                  num_tc=num_tc, vmem_budget=vmem_budget)
    else:
        row_tile = max(sub, (int(row_tile) // sub) * sub)

    # No row padding: the (possibly partial) boundary block's out-of-range
    # writes are masked by Pallas (safe: no cross-row coupling in RMSNorm).
    grid = (pl.cdiv(rows, row_tile),)

    # Scoped-VMEM limit from the SAME per-row accounting used for the budget.
    needed = row_tile * _per_row_vmem_bytes(dim_p, itemsize) + 2 * dim_p * 4
    vmem_limit = int(min(vmem_cap - (12 << 20), max(needed + (4 << 20), 32 << 20)))

    cost = pl.CostEstimate(
        flops=int(4 * rows * dim),
        transcendentals=int(rows),
        bytes_accessed=int(2 * rows * dim * itemsize + dim * 4),
    )

    out = pl.pallas_call(
        functools.partial(_rmsnorm_kernel, eps=eps, inv_dim=1.0 / dim),
        out_shape=jax.ShapeDtypeStruct((rows, dim_p), x.dtype),
        grid_spec=pltpu.PrefetchScalarGridSpec(
            num_scalar_prefetch=0,
            grid=grid,
            in_specs=[
                pl.BlockSpec((row_tile, dim_p), lambda i: (i, 0)),
                pl.BlockSpec((1, dim_p), lambda i: (0, 0)),
            ],
            out_specs=pl.BlockSpec((row_tile, dim_p), lambda i: (i, 0)),
        ),
        compiler_params=pltpu.CompilerParams(
            dimension_semantics=("parallel",),
            vmem_limit_bytes=vmem_limit),
        cost_estimate=cost,
    )(x2d, w2d)

    if dim_p != dim:
        out = out[:, :dim]
    return out.reshape(orig_shape)


def _rms_norm_ref(x, weight, eps=1e-6):
    xf = x.astype(jnp.float32)
    ms = jnp.mean(xf * xf, axis=-1, keepdims=True)
    return (xf * jax.lax.rsqrt(ms + eps) * weight.astype(jnp.float32)).astype(x.dtype)


if __name__ == "__main__":
    key = jax.random.PRNGKey(0)
    batch, seq, hidden = 2, 8, 32

    x = jax.random.normal(key, (batch, seq, hidden), dtype=jnp.float32)
    # nn.Parameter(torch.ones(dim), requires_grad=False) — ones init.
    weight = jnp.ones((hidden,), dtype=jnp.float32)

    y = rms_norm(x, weight, eps=1e-6)
    jax.block_until_ready(y)

    y_ref = _rms_norm_ref(x, weight, eps=1e-6)
    assert y.shape == x.shape and y.dtype == x.dtype
    assert jnp.allclose(y, y_ref, atol=1e-5, rtol=1e-5)

    print("KERNEL_OK")
</pallas_src>

<mosaic_0001>
module attributes {stable_mosaic.version = 11 : i64} {
  func.func @_rmsnorm_kernel(%arg0: i32, %arg1: memref<16x128xf32, #tpu.memory_space<vmem>>, %arg2: memref<1x128xf32, #tpu.memory_space<vmem>>, %arg3: memref<16x128xf32, #tpu.memory_space<vmem>>) attributes {dimension_semantics = [#tpu.dimension_semantics<parallel>], iteration_bounds = array<i64: 1>, scalar_prefetch = 0 : i64, scratch_operands = 0 : i64, tpu.core_type = #tpu.core_type<tc>, window_params = [{transform_indices = @transform_0, window_bounds = array<i64: 16, 128>}, {pipeline_mode = #tpu.pipeline_mode<synchronous>, transform_indices = @transform_1, window_bounds = array<i64: 1, 128>}, {transform_indices = @transform_2, window_bounds = array<i64: 16, 128>}]} {
    %c0 = arith.constant 0 : index
    %c0_0 = arith.constant 0 : index
    %0 = vector.load %arg1[%c0, %c0_0] : memref<16x128xf32, #tpu.memory_space<vmem>>, vector<16x128xf32>
    %1 = arith.mulf %0, %0 : vector<16x128xf32>
    %cst = arith.constant dense<0.000000e+00> : vector<16xf32>
    %2 = vector.multi_reduction <add>, %1, %cst [1] : vector<16x128xf32> to vector<16xf32>
    %3 = vector.shape_cast %2 : vector<16xf32> to vector<16x1xf32>
    %cst_1 = arith.constant 3.125000e-02 : f32
    %4 = vector.broadcast %cst_1 : f32 to vector<16x1xf32>
    %5 = arith.mulf %3, %4 : vector<16x1xf32>
    %cst_2 = arith.constant 9.99999997E-7 : f32
    %6 = vector.broadcast %cst_2 : f32 to vector<16x1xf32>
    %7 = arith.addf %5, %6 : vector<16x1xf32>
    %8 = math.rsqrt %7 : vector<16x1xf32>
    %9 = vector.broadcast %8 : vector<16x1xf32> to vector<16x128xf32>
    %10 = arith.mulf %0, %9 : vector<16x128xf32>
    %c0_3 = arith.constant 0 : index
    %c0_4 = arith.constant 0 : index
    %11 = vector.load %arg2[%c0_3, %c0_4] : memref<1x128xf32, #tpu.memory_space<vmem>>, vector<1x128xf32>
    %12 = vector.broadcast %11 : vector<1x128xf32> to vector<16x128xf32>
    %13 = arith.mulf %10, %12 : vector<16x128xf32>
    %c0_5 = arith.constant 0 : index
    %c0_6 = arith.constant 0 : index
    %14 = vector.load %arg3[%c0_5, %c0_6] : memref<16x128xf32, #tpu.memory_space<vmem>>, vector<16x128xf32>
    tpu.vector_store %arg3[%c0_5, %c0_6], %13 {strides = array<i32>} : memref<16x128xf32, #tpu.memory_space<vmem>>, vector<16x128xf32>,
    return
  }
  func.func @transform_0(%arg0: i32) -> (i32, i32) {
    %c0_i32 = arith.constant 0 : i32
    %c0_i32_0 = arith.constant 0 : i32
    return %arg0, %c0_i32 : i32, i32
  }
  func.func @transform_1(%arg0: i32) -> (i32, i32) {
    %c0_i32 = arith.constant 0 : i32
    %c0_i32_0 = arith.constant 0 : i32
    %c0_i32_1 = arith.constant 0 : i32
    return %c0_i32, %c0_i32_0 : i32, i32
  }
  func.func @transform_2(%arg0: i32) -> (i32, i32) {
    %c0_i32 = arith.constant 0 : i32
    %c0_i32_0 = arith.constant 0 : i32
    return %arg0, %c0_i32 : i32, i32
  }
}

</mosaic_0001>

<llo_original>
// kernel: tpu_custom_call.1
$region0: #{tpu_custom_call.1}
  #allocation0 [shape = 'u32[]', space=smem, size = 0x4, offset = 0x4, fixed_abs, tag = 'smem constant byte address 0x4 - core index']
  #allocation1 [shape = 'u32[72,128]{1,0:T(1,128)}', space=vmem, size = 0x9000, scoped, tag = 'internal scratch']
  %s0 = inlined_call_operand.hbm [shape: f32[16,128], index: 0, kind: input, shape index: {}]
  %s1 = inlined_call_operand.hbm [shape: f32[1,128], index: 1, kind: input, shape index: {}]
  %s2 = inlined_call_operand.hbm [shape: f32[16,128], index: 2, kind: output, shape index: {}]
  %s3 = sld [smem:[#allocation0]]
  $region26: #{tpu_custom_call.1} parent=0
    _
  %s5 = ssub.s32 1, %s3
  %s6 = scalar_select 0, %s5, %s3
  $region1: #{tpu_custom_call.1} parent=0
    #allocation2 [shape = 'u8[8192]{0}', space=vmem, size = 0x2000, scoped, tag = 'input window, operand 0, single buffered']
    #allocation3 [shape = 's32[1]{0}', space=sflag, size = 0x4, scoped, tag = 'scoped memory for tpu_custom_call.1']
    #allocation4 [shape = 's32[1]{0}', space=sflag, size = 0x4, scoped, tag = 'scoped memory for tpu_custom_call.1']
    #allocation5 [shape = 'u8[512]{0}', space=vmem, size = 0x400, scoped, tag = 'input window, operand 1, single buffered']
    #allocation6 [shape = 's32[1]{0}', space=sflag, size = 0x4, scoped, tag = 'scoped memory for tpu_custom_call.1']
    #allocation7 [shape = 'u8[8192]{0}', space=vmem, size = 0x2000, scoped, tag = 'output window, operand 0, single buffered']
    %7 = vsyncpa [#allocation3], 0
    %8 = vsyncpa [#allocation6], 0
    %9 = vsyncpa [#allocation4], 0
    // Predicated region
    $region2: #{tpu_custom_call.1} parent=1 // pred_check
      _
    $region3: #{tpu_custom_call.1} parent=1 // pred_check_branch
      %11 = sbr.rel (0) target = $region5
    $region4: #{tpu_custom_call.1} parent=1 // pred_region
      %13 = vsyncadd [#allocation3], 0
      %s14 = sshll.u32 %s0, 4
      %s15 = int_to_ptr.hbm [resolvable:$true] %s14
      %s16 = sshll.u32 [#allocation2], 4
      %s17 = int_to_ptr.vmem [resolvable:$true] %s16
      %22 = dma.hbm_to_vmem [thread:$0]  %s15, 256, %s17, [#allocation3], 128, 128, 8
    $region5: #{tpu_custom_call.1} parent=1 // pred_fallthru
      _
    // Predicated region
    $region6: #{tpu_custom_call.1} parent=1 // pred_check
      _
    $region7: #{tpu_custom_call.1} parent=1 // pred_check_branch
      %24 = sbr.rel (0) target = $region9
    $region8: #{tpu_custom_call.1} parent=1 // pred_region
      %26 = vsyncadd [#allocation6], 0
      %s28 = sshll.u32 %s1, 4
      %s29 = int_to_ptr.hbm [resolvable:$true] %s28
      %s30 = sshll.u32 [#allocation5], 4
      %s31 = int_to_ptr.vmem [resolvable:$true] %s30
      %33 = dma.hbm_to_vmem [thread:$0]  %s29, 16, %s31, [#allocation6]
    $region9: #{tpu_custom_call.1} parent=1 // pred_fallthru
      _
    // Predicated region
    $region10: #{tpu_custom_call.1} parent=1 // pred_check
      _
    $region11: #{tpu_custom_call.1} parent=1 // pred_check_branch
      %35 = sbr.rel (0) target = $region13
    $region12: #{tpu_custom_call.1} parent=1 // pred_region
      %37 = dma.done [#allocation3], 256
    $region13: #{tpu_custom_call.1} parent=1 // pred_fallthru
      _
    // Predicated region
    $region14: #{tpu_custom_call.1} parent=1 // pred_check
      _
    $region15: #{tpu_custom_call.1} parent=1 // pred_check_branch
      %39 = sbr.rel (0) target = $region17
    $region16: #{tpu_custom_call.1} parent=1 // pred_region
      %41 = dma.done [#allocation6], 16
    $region17: #{tpu_custom_call.1} parent=1 // pred_fallthru
      _
    %v42 = vld [vmem:[#allocation2] sm:$0xff]
    %v43 = vld [vmem:[#allocation2 + $0x8] sm:$0xff]
    %v44 = vmul.f32 %v42, %v42
    %v45 = vmul.f32 %v43, %v43
    %46 = vadd.xlane.f32.xlu0 %v44
    %v47 = vpop.xlane.xlu0 %46
    %48 = vadd.xlane.f32.xlu0 %v45
    %v49 = vpop.xlane.xlu0 %48
    %v50 = vmul.f32 %v47, 0.03125
    %v51 = vmul.f32 %v49, 0.03125
    %v52 = vadd.f32 %v50, 1e-06
    %v53 = vadd.f32 %v51, 1e-06
    %v54 = vrsqrt.pop %v52
    %v55 = vmul.f32 %v54, %v52
    %v56 = vmul.f32 %v55, %v54
    %v57 = vmul.f32 0.5, %v56
    %v58 = vsub.f32 1.5, %v57
    %v59 = vmul.f32 %v54, %v58
    %vm60 = vweird.f32 %v52
    %vm61 = vweird.f32 %v54
    %vm62 = vmor %vm60, %vm61
    %v63 = vsel %vm62, %v54, %v59
    %v64 = vrsqrt.pop %v53
    %v65 = vmul.f32 %v64, %v53
    %v66 = vmul.f32 %v65, %v64
    %v67 = vmul.f32 0.5, %v66
    %v68 = vsub.f32 1.5, %v67
    %v69 = vmul.f32 %v64, %v68
    %vm70 = vweird.f32 %v53
    %vm71 = vweird.f32 %v64
    %vm72 = vmor %vm70, %vm71
    %v73 = vsel %vm72, %v64, %v69
    %v74 = vmul.f32 %v42, %v63
    %v75 = vmul.f32 %v43, %v73
    %v76 = vld [vmem:[#allocation5] sm:$0x1]
    %v78 = vperm.slane %v76, 0
    %v80 = vmul.f32 %v74, %v78
    %v81 = vmul.f32 %v75, %v78
    %82 = vst [vmem:[#allocation7] sm:$0xff] %v80
    %83 = vst [vmem:[#allocation7 + $0x8] sm:$0xff] %v81
    // Predicated region
    $region18: #{tpu_custom_call.1} parent=1 // pred_check
      _
    $region19: #{tpu_custom_call.1} parent=1 // pred_check_branch
      %85 = sbr.rel (0) target = $region21
    $region20: #{tpu_custom_call.1} parent=1 // pred_region
      %87 = vsyncadd [#allocation4], 0
      %s88 = sshll.u32 [#allocation7], 4
      %s89 = int_to_ptr.vmem [resolvable:$true] %s88
      %s90 = sshll.u32 %s2, 4
      %s91 = int_to_ptr.hbm [resolvable:$true] %s90
      %96 = dma.vmem_to_hbm [thread:$0]  %s89, 256, %s91, [#allocation4], 128, 128, 8
    $region21: #{tpu_custom_call.1} parent=1 // pred_fallthru
      _
    // Predicated region
    $region22: #{tpu_custom_call.1} parent=1 // pred_check
      _
    $region23: #{tpu_custom_call.1} parent=1 // pred_check_branch
      %98 = sbr.rel (0) target = $region25
    $region24: #{tpu_custom_call.1} parent=1 // pred_region
      %100 = dma.done [#allocation4], 256
    $region25: #{tpu_custom_call.1} parent=1 // pred_fallthru
      _
    %101 = vsyncpa [#allocation3], 1
    %102 = vsyncpa [#allocation6], 1
    %103 = vsyncpa [#allocation4], 1

</llo_original>
